<compile_context>
chip_gen: v6e
topology: v6e:2x2x1
jax: 0.10.0
libtpu: 0.0.40
codegen_flags: <defaults>
</compile_context>

<pallas_src>
import jax
import jax.numpy as jnp
from jax.experimental import pallas as pl
from jax.experimental.pallas import tpu as pltpu

EPS = 1e-6


def _encoder_norm_kernel(x_ref, params_ref, o_ref):
    # x_ref: (TILE_ROWS, d_model) tile in VMEM; params_ref: f32[2] in SMEM.
    x = x_ref[...].astype(jnp.float32)
    d = x.shape[-1]

    # Fused one-pass statistics: sum(x) and sum(x*x) over the lane axis.
    s1 = jnp.sum(x, axis=-1, keepdims=True)
    s2 = jnp.sum(x * x, axis=-1, keepdims=True)
    mean = s1 * (1.0 / d)
    # torch.std default is the unbiased estimator (ddof=1):
    #   var = (sum(x^2) - sum(x)^2 / d) / (d - 1)
    # (degenerate d_model == 1 would divide by zero, as in PyTorch)
    var = (s2 - s1 * mean) / (d - 1)
    var = jnp.maximum(var, 0.0)  # guard tiny negative values from cancellation
    std = jnp.sqrt(var)

    # Per-row reciprocal on the EUP; one Newton step restores ~f32 accuracy.
    denom = std + EPS
    inv = pl.reciprocal(denom, approx=True)
    inv = inv * (2.0 - denom * inv)  # (rows, 1) only -> essentially free

    alpha = params_ref[0]
    bias = params_ref[1]
    o_ref[...] = (alpha * ((x - mean) * inv) + bias).astype(o_ref.dtype)


def encoder_forward(x, mask, alpha, bias, *, tile_rows=512):
    """Encoder forward: (no sub-layers) -> LayerNormalization(x).

    x:     (batch, seq, d_model)
    mask:  unused (kept for signature parity with the PyTorch module)
    alpha: scalar parameter, shape (1,)
    bias:  scalar parameter, shape (1,)
    """
    del mask  # no attention layers in this synthetic Encoder instance
    b, s, d = x.shape
    rows = b * s
    x2d = x.reshape(rows, d)
    params = jnp.concatenate([alpha, bias]).astype(jnp.float32)  # f32[2] -> SMEM

    # Tile the row axis. If the array is small, take it whole (always legal);
    # otherwise use a multiple-of-8 tile (tile_rows default 512 satisfies it).
    tile = rows if rows <= tile_rows else tile_rows
    grid = (pl.cdiv(rows, tile),)

    out2d = pl.pallas_call(
        _encoder_norm_kernel,
        out_shape=jax.ShapeDtypeStruct((rows, d), x.dtype),
        grid_spec=pltpu.PrefetchScalarGridSpec(
            num_scalar_prefetch=0,
            grid=grid,
            in_specs=[
                pl.BlockSpec((tile, d), lambda i: (i, 0)),
                pl.BlockSpec(memory_space=pltpu.MemorySpace.SMEM),
            ],
            out_specs=pl.BlockSpec((tile, d), lambda i: (i, 0)),
        ),
        compiler_params=pltpu.CompilerParams(
            dimension_semantics=("parallel",),   # row-parallel -> 2 TCs on v7x
            vmem_limit_bytes=64 << 20,
        ),
    )(x2d, params)
    return out2d.reshape(b, s, d)


def reference_forward(x, alpha, bias):
    # Pure-JAX reference mirroring PyTorch semantics (unbiased std, two-pass).
    mean = jnp.mean(x, axis=-1, keepdims=True)
    d = x.shape[-1]
    var = jnp.sum((x - mean) ** 2, axis=-1, keepdims=True) / (d - 1)
    std = jnp.sqrt(var)
    return alpha[0] * (x - mean) / (std + EPS) + bias[0]


if __name__ == "__main__":
    key = jax.random.PRNGKey(0)
    # Small but lane-dense test shape (d_model multiple of 128).
    batch, seq, d_model = 2, 64, 128
    x = jax.random.normal(key, (batch, seq, d_model), dtype=jnp.float32)
    mask = jnp.ones((batch, 1, seq, seq), dtype=jnp.float32)  # unused

    # Deterministic parameter init matching nn.Parameter(torch.ones(1)/zeros(1))
    alpha = jnp.ones((1,), dtype=jnp.float32)
    bias = jnp.zeros((1,), dtype=jnp.float32)

    # tile_rows=64 exercises a multi-step, pipelined grid even at this size.
    out = encoder_forward(x, mask, alpha, bias, tile_rows=64)
    out = jax.block_until_ready(out)

    ref = reference_forward(x, alpha, bias)
    assert out.shape == (batch, seq, d_model)
    assert jnp.allclose(out, ref, atol=2e-5, rtol=2e-5)
    print("KERNEL_OK")
</pallas_src>

<mosaic_0001>
module attributes {stable_mosaic.version = 11 : i64} {
  func.func @_encoder_norm_kernel(%arg0: i32, %arg1: memref<64x128xf32, #tpu.memory_space<vmem>>, %arg2: memref<2xf32, #tpu.memory_space<smem>>, %arg3: memref<64x128xf32, #tpu.memory_space<vmem>>) attributes {dimension_semantics = [#tpu.dimension_semantics<parallel>], iteration_bounds = array<i64: 2>, scalar_prefetch = 0 : i64, scratch_operands = 0 : i64, tpu.core_type = #tpu.core_type<tc>, window_params = [{transform_indices = @transform_0, window_bounds = array<i64: 64, 128>}, {transform_indices = @transform_1, window_bounds = array<i64: 2>}, {transform_indices = @transform_2, window_bounds = array<i64: 64, 128>}]} {
    %c0 = arith.constant 0 : index
    %c0_0 = arith.constant 0 : index
    %0 = vector.load %arg1[%c0, %c0_0] : memref<64x128xf32, #tpu.memory_space<vmem>>, vector<64x128xf32>
    %cst = arith.constant dense<0.000000e+00> : vector<64xf32>
    %1 = vector.multi_reduction <add>, %0, %cst [1] : vector<64x128xf32> to vector<64xf32>
    %2 = vector.shape_cast %1 : vector<64xf32> to vector<64x1xf32>
    %3 = arith.mulf %0, %0 : vector<64x128xf32>
    %cst_1 = arith.constant dense<0.000000e+00> : vector<64xf32>
    %4 = vector.multi_reduction <add>, %3, %cst_1 [1] : vector<64x128xf32> to vector<64xf32>
    %5 = vector.shape_cast %4 : vector<64xf32> to vector<64x1xf32>
    %cst_2 = arith.constant 7.812500e-03 : f32
    %6 = vector.broadcast %cst_2 : f32 to vector<64x1xf32>
    %7 = arith.mulf %2, %6 : vector<64x1xf32>
    %8 = arith.mulf %2, %7 : vector<64x1xf32>
    %9 = arith.subf %5, %8 : vector<64x1xf32>
    %cst_3 = arith.constant 1.270000e+02 : f32
    %10 = vector.broadcast %cst_3 : f32 to vector<64x1xf32>
    %11 = arith.divf %9, %10 : vector<64x1xf32>
    %cst_4 = arith.constant 0.000000e+00 : f32
    %12 = vector.broadcast %cst_4 : f32 to vector<64x1xf32>
    %13 = arith.maximumf %11, %12 : vector<64x1xf32>
    %14 = math.sqrt %13 : vector<64x1xf32>
    %cst_5 = arith.constant 9.99999997E-7 : f32
    %15 = vector.broadcast %cst_5 : f32 to vector<64x1xf32>
    %16 = arith.addf %14, %15 : vector<64x1xf32>
    %17 = tpu.reciprocal %16 {approx = true} : vector<64x1xf32> -> vector<64x1xf32>
    %18 = arith.mulf %16, %17 : vector<64x1xf32>
    %cst_6 = arith.constant 2.000000e+00 : f32
    %19 = vector.broadcast %cst_6 : f32 to vector<64x1xf32>
    %20 = arith.subf %19, %18 : vector<64x1xf32>
    %21 = arith.mulf %17, %20 : vector<64x1xf32>
    %c0_7 = arith.constant 0 : index
    %22 = memref.load %arg2[%c0_7] : memref<2xf32, #tpu.memory_space<smem>>
    %c1 = arith.constant 1 : index
    %23 = memref.load %arg2[%c1] : memref<2xf32, #tpu.memory_space<smem>>
    %24 = vector.broadcast %7 : vector<64x1xf32> to vector<64x128xf32>
    %25 = arith.subf %0, %24 : vector<64x128xf32>
    %26 = vector.broadcast %21 : vector<64x1xf32> to vector<64x128xf32>
    %27 = arith.mulf %25, %26 : vector<64x128xf32>
    %28 = vector.broadcast %22 : f32 to vector<64x128xf32>
    %29 = arith.mulf %28, %27 : vector<64x128xf32>
    %30 = vector.broadcast %23 : f32 to vector<64x128xf32>
    %31 = arith.addf %29, %30 : vector<64x128xf32>
    %c0_8 = arith.constant 0 : index
    %c0_9 = arith.constant 0 : index
    %32 = vector.load %arg3[%c0_8, %c0_9] : memref<64x128xf32, #tpu.memory_space<vmem>>, vector<64x128xf32>
    tpu.vector_store %arg3[%c0_8, %c0_9], %31 {strides = array<i32>} : memref<64x128xf32, #tpu.memory_space<vmem>>, vector<64x128xf32>,
    return
  }
  func.func @transform_0(%arg0: i32) -> (i32, i32) {
    %c0_i32 = arith.constant 0 : i32
    %c0_i32_0 = arith.constant 0 : i32
    return %arg0, %c0_i32 : i32, i32
  }
  func.func @transform_1(%arg0: i32) -> i32 {
    %c0_i32 = arith.constant 0 : i32
    %c0_i32_0 = arith.constant 0 : i32
    return %c0_i32 : i32
  }
  func.func @transform_2(%arg0: i32) -> (i32, i32) {
    %c0_i32 = arith.constant 0 : i32
    %c0_i32_0 = arith.constant 0 : i32
    return %arg0, %c0_i32 : i32, i32
  }
}

</mosaic_0001>

<llo_original>
// kernel: tpu_custom_call.1
$region0: #{tpu_custom_call.1}
  #allocation0 [shape = 'u32[]', space=smem, size = 0x4, offset = 0x4, fixed_abs, tag = 'smem constant byte address 0x4 - core index']
  #allocation1 [shape = 'u32[144,128]{1,0:T(1,128)}', space=vmem, size = 0x12000, scoped, tag = 'internal scratch']
  %s0 = inlined_call_operand.hbm [shape: f32[128,128], index: 0, kind: input, shape index: {}]
  %s1 = inlined_call_operand.vmem [shape: f32[2], index: 1, kind: input, shape index: {}]
  %s2 = inlined_call_operand.hbm [shape: f32[128,128], index: 2, kind: output, shape index: {}]
  %s3 = sld [smem:[#allocation0]]
  $region49: #{tpu_custom_call.1} parent=0
    _
  %s5 = ssub.s32 1, %s3
  %s6 = scalar_select 0, %s5, %s3
  $region1: #{tpu_custom_call.1} parent=0
    #allocation2 [shape = 'u8[65536]{0}', space=vmem, size = 0x10000, scoped, tag = 'input window, operand 0']
    #allocation3 [shape = 's32[2]{0}', space=sflag, size = 0x8, scoped, tag = 'scoped memory for tpu_custom_call.1']
    #allocation4 [shape = 's32[2]{0}', space=sflag, size = 0x8, scoped, tag = 'scoped memory for tpu_custom_call.1']
    #allocation5 [shape = 's32[2]{0}', space=sflag, size = 0x8, scoped, tag = 'scoped memory for tpu_custom_call.1']
    #allocation6 [shape = 'u8[512]{0}', space=smem, size = 0x200, scoped, tag = 'input window, operand 1, single buffered']
    #allocation7 [shape = 'u8[65536]{0}', space=vmem, size = 0x10000, scoped, tag = 'output window, operand 0']
    %7 = vsyncpa [#allocation3], 0
    %s8 = scalar_lea.sflag [#allocation3], 1
    %9 = vsyncpa %s8, 0
    %10 = vsyncpa [#allocation5], 0
    %11 = vsyncpa [#allocation4], 0
    %s12 = scalar_lea.sflag [#allocation4], 1
    %13 = vsyncpa %s12, 0
    loop: start=0, step=1, limit=4
    $region2: #{tpu_custom_call.1} parent=1 // loop_pre_header
      _
    $region3: #{tpu_custom_call.1} parent=1 // loop_header
      %s15 = sphi 0, %s19
      %p16 = scmp.ge.s32.totalorder %s15, 4
      %s25 = sphi 0, %s27
      %s28 = sphi 0, %s25
      %s29 = sphi 0, %s28
      %s45 = sphi 0, %s29
      %s49 = sphi 0, %s49
      %s51 = sphi 0, %s49
      %s52 = sphi 0, %s51
      %s66 = sphi 0, %s52
      %s72 = sphi 0, %s74
      %s75 = sphi 0, %s72
      %s76 = sphi 0, %s75
      %s92 = sphi 0, %s76
    $region4: #{tpu_custom_call.1} parent=1 // loop_header_branch
      %18 = sbr.rel (%p16) target = $region8
    $region5: #{tpu_custom_call.1} parent=1 // loop_body
      %s20 = ssub.s32 %s15, 1
      %s21 = ssub.s32 %s15, 2
      %s22 = sadd.s32 %s15, 1
      %s23 = ssub.s32 %s15, %s22
      %p24 = scmp.eq.s32.totalorder %s23, 0
      %s26 = sadd.s32 %s25, 1
      %s27 = scalar_select %p24, %s25, %s26
      %p30 = pneg %p24
      %p31 = scmp.eq.s32.totalorder %s15, 1
      %p32 = por %p30, %p31
      %p33 = scmp.ne.s32.totalorder %s25, %s28
      %p34 = scmp.eq.s32.totalorder %s15, 0
      %p35 = por %p33, %p34
      %p36 = scmp.ne.s32.totalorder %s25, %s28
      %p37 = scmp.eq.s32.totalorder %s20, 1
      %p38 = por %p36, %p37
      %p39 = scmp.ne.s32.totalorder %s28, %s29
      %p40 = scmp.eq.s32.totalorder %s20, 0
      %p41 = por %p39, %p40
      %p42 = scmp.ne.s32.totalorder %s28, %s29
      %p43 = scmp.eq.s32.totalorder %s21, 1
      %p44 = por %p42, %p43
      %p46 = scmp.ne.s32.totalorder %s29, %s45
      %p47 = scmp.eq.s32.totalorder %s21, 0
      %p48 = por %p46, %p47
      %s50 = sadd.s32 %s49, 1
      %p53 = scmp.eq.s32.totalorder %s15, 1
      %p54 = scmp.ne.s32.totalorder %s49, %s51
      %p55 = scmp.eq.s32.totalorder %s15, 0
      %p56 = por %p54, %p55
      %p57 = scmp.ne.s32.totalorder %s49, %s51
      %p58 = scmp.eq.s32.totalorder %s20, 1
      %p59 = por %p57, %p58
      %p60 = scmp.ne.s32.totalorder %s51, %s52
      %p61 = scmp.eq.s32.totalorder %s20, 0
      %p62 = por %p60, %p61
      %p63 = scmp.ne.s32.totalorder %s51, %s52
      %p64 = scmp.eq.s32.totalorder %s21, 1
      %p65 = por %p63, %p64
      %p67 = scmp.ne.s32.totalorder %s52, %s66
      %p68 = scmp.eq.s32.totalorder %s21, 0
      %p69 = por %p67, %p68
      %s70 = ssub.s32 %s15, %s22
      %p71 = scmp.eq.s32.totalorder %s70, 0
      %s73 = sadd.s32 %s72, 1
      %s74 = scalar_select %p71, %s72, %s73
      %p77 = pneg %p71
      %p78 = scmp.eq.s32.totalorder %s15, 1
      %p79 = por %p77, %p78
      %p80 = scmp.ne.s32.totalorder %s72, %s75
      %p81 = scmp.eq.s32.totalorder %s15, 0
      %p82 = por %p80, %p81
      %p83 = scmp.ne.s32.totalorder %s72, %s75
      %p84 = scmp.eq.s32.totalorder %s20, 1
      %p85 = por %p83, %p84
      %p86 = scmp.ne.s32.totalorder %s75, %s76
      %p87 = scmp.eq.s32.totalorder %s20, 0
      %p88 = por %p86, %p87
      %p89 = scmp.ne.s32.totalorder %s75, %s76
      %p90 = scmp.eq.s32.totalorder %s21, 1
      %p91 = por %p89, %p90
      %p93 = scmp.ne.s32.totalorder %s76, %s92
      %p94 = scmp.eq.s32.totalorder %s21, 0
      %p95 = por %p93, %p94
      %p96 = scmp.le.s32.totalorder 1, %s15
      %p97 = scmp.lt.s32.totalorder %s15, 3
      %p98 = pnand %p96, %p97
      %p99 = pneg %p98
      // Predicated region
      $region9: #{tpu_custom_call.1} parent=5 // pred_check
        _
      $region10: #{tpu_custom_call.1} parent=5 // pred_check_branch
        %101 = sbr.rel (%p98) target = $region12
      $region11: #{tpu_custom_call.1} parent=5 // pred_region
        %s102 = ssub.s32 %s15, 1
        // Predicated region
        $region13: #{tpu_custom_call.1} parent=11 // pred_check
          %p103 = pneg %p62
        $region14: #{tpu_custom_call.1} parent=11 // pred_check_branch
          %105 = sbr.rel (%p103) target = $region16
        $region15: #{tpu_custom_call.1} parent=11 // pred_region
          %s107 = ssub.s32 16, 16
          %108 = vsyncadd [#allocation5], %s107
          %s110 = sshll.u32 %s1, 4
          %s111 = int_to_ptr.vmem [resolvable:$true] %s110
          %113 = dma.vmem_to_smem %s111, 16, [#allocation6], [#allocation5]
        $region16: #{tpu_custom_call.1} parent=11 // pred_fallthru
          _
      $region12: #{tpu_custom_call.1} parent=5 // pred_fallthru
        _
      %p114 = scmp.lt.s32.totalorder %s15, 2
      // Predicated region
      $region17: #{tpu_custom_call.1} parent=5 // pred_check
        %p115 = pneg %p114
      $region18: #{tpu_custom_call.1} parent=5 // pred_check_branch
        %117 = sbr.rel (%p115) target = $region20
      $region19: #{tpu_custom_call.1} parent=5 // pred_region
        // Predicated region
        $region21: #{tpu_custom_call.1} parent=19 // pred_check
          %p118 = pneg %p35
        $region22: #{tpu_custom_call.1} parent=19 // pred_check_branch
          %120 = sbr.rel (%p118) target = $region24
        $region23: #{tpu_custom_call.1} parent=19 // pred_region
          %s121 = sand.u32 %s25, 1
          %s122 = scalar_lea.sflag [#allocation3], %s121
          %s123 = sand.u32 %s25, 1
          %s124 = smul.addr %s123, 64
          %s125 = scalar_lea.vmem [#allocation2], %s124
          %s126 = smul.u32 8, %s15
          %s128 = ssub.s32 1024, 1024
          %129 = vsyncadd %s122, %s128
          %s130 = smul.addr %s126, 128
          %s131 = scalar_lea.hbm %s0, %s130
          %s132 = sshll.u32 %s125, 4
          %s133 = int_to_ptr.vmem [resolvable:$true] %s132
          %138 = dma.hbm_to_vmem [thread:$0]  %s131, 1024, %s133, %s122, 128, 128, 8
        $region24: #{tpu_custom_call.1} parent=19 // pred_fallthru
          _
      $region20: #{tpu_custom_call.1} parent=5 // pred_fallthru
        _
      %p139 = scmp.le.s32.totalorder 1, %s15
      %p140 = scmp.lt.s32.totalorder %s15, 3
      %p141 = pnand %p139, %p140
      %p142 = pneg %p141
      // Predicated region
      $region25: #{tpu_custom_call.1} parent=5 // pred_check
        _
      $region26: #{tpu_custom_call.1} parent=5 // pred_check_branch
        %144 = sbr.rel (%p141) target = $region28
      $region27: #{tpu_custom_call.1} parent=5 // pred_region
        %s145 = ssub.s32 %s15, 1
        %s146 = sand.u32 %s28, 1
        %s147 = scalar_lea.sflag [#allocation3], %s146
        %s148 = sand.u32 %s28, 1
        %s149 = smul.addr %s148, 64
        %s150 = scalar_lea.vmem [#allocation2], %s149
        // Predicated region
        $region29: #{tpu_custom_call.1} parent=27 // pred_check
          %p151 = pneg %p41
        $region30: #{tpu_custom_call.1} parent=27 // pred_check_branch
          %153 = sbr.rel (%p151) target = $region32
        $region31: #{tpu_custom_call.1} parent=27 // pred_region
          %154 = dma.done %s147, 1024
        $region32: #{tpu_custom_call.1} parent=27 // pred_fallthru
          _
        // Predicated region
        $region33: #{tpu_custom_call.1} parent=27 // pred_check
          %p155 = pneg %p62
        $region34: #{tpu_custom_call.1} parent=27 // pred_check_branch
          %157 = sbr.rel (%p155) target = $region36
        $region35: #{tpu_custom_call.1} parent=27 // pred_region
          %158 = dma.done [#allocation5], 16
        $region36: #{tpu_custom_call.1} parent=27 // pred_fallthru
          _
        %159 = sfence
        %s160 = sand.u32 %s28, 1
        %s161 = scalar_lea.sflag [#allocation3], %s160
        %s162 = sand.u32 %s28, 1
        %s163 = smul.addr %s162, 64
        %s164 = scalar_lea.vmem [#allocation2], %s163
        %p165 = pneg %p41
        %p166 = pneg %p38
        %p167 = pneg %p62
        %p168 = pneg %p59
        %p169 = pneg %p88
        %p170 = pneg %p85
        %s171 = sand.u32 %s75, 1
        %s172 = scalar_lea.sflag [#allocation4], %s171
        %s173 = sand.u32 %s75, 1
        %s174 = smul.addr %s173, 64
        %s175 = scalar_lea.vmem [#allocation7], %s174
        %s176 = smul.u32 8, %s20
        %s177 = smul.u32 8, %s20
        %v178 = vld [vmem:[%s150] sm:$0xff]
        %v179 = vld [vmem:[%s150 + $0x8] sm:$0xff]
        %v180 = vld [vmem:[%s150 + $0x10] sm:$0xff]
        %v181 = vld [vmem:[%s150 + $0x18] sm:$0xff]
        %v182 = vld [vmem:[%s150 + $0x20] sm:$0xff]
        %v183 = vld [vmem:[%s150 + $0x28] sm:$0xff]
        %v184 = vld [vmem:[%s150 + $0x30] sm:$0xff]
        %v185 = vld [vmem:[%s150 + $0x38] sm:$0xff]
        %186 = vadd.xlane.f32.xlu0 %v178
        %v187 = vpop.xlane.xlu0 %186
        %188 = vadd.xlane.f32.xlu0 %v179
        %v189 = vpop.xlane.xlu0 %188
        %190 = vadd.xlane.f32.xlu0 %v180
        %v191 = vpop.xlane.xlu0 %190
        %192 = vadd.xlane.f32.xlu0 %v181
        %v193 = vpop.xlane.xlu0 %192
        %194 = vadd.xlane.f32.xlu0 %v182
        %v195 = vpop.xlane.xlu0 %194
        %196 = vadd.xlane.f32.xlu0 %v183
        %v197 = vpop.xlane.xlu0 %196
        %198 = vadd.xlane.f32.xlu0 %v184
        %v199 = vpop.xlane.xlu0 %198
        %200 = vadd.xlane.f32.xlu0 %v185
        %v201 = vpop.xlane.xlu0 %200
        %v202 = vmul.f32 %v178, %v178
        %v203 = vmul.f32 %v179, %v179
        %v204 = vmul.f32 %v180, %v180
        %v205 = vmul.f32 %v181, %v181
        %v206 = vmul.f32 %v182, %v182
        %v207 = vmul.f32 %v183, %v183
        %v208 = vmul.f32 %v184, %v184
        %v209 = vmul.f32 %v185, %v185
        %210 = vadd.xlane.f32.xlu0 %v202
        %v211 = vpop.xlane.xlu0 %210
        %212 = vadd.xlane.f32.xlu0 %v203
        %v213 = vpop.xlane.xlu0 %212
        %214 = vadd.xlane.f32.xlu0 %v204
        %v215 = vpop.xlane.xlu0 %214
        %216 = vadd.xlane.f32.xlu0 %v205
        %v217 = vpop.xlane.xlu0 %216
        %218 = vadd.xlane.f32.xlu0 %v206
        %v219 = vpop.xlane.xlu0 %218
        %220 = vadd.xlane.f32.xlu0 %v207
        %v221 = vpop.xlane.xlu0 %220
        %222 = vadd.xlane.f32.xlu0 %v208
        %v223 = vpop.xlane.xlu0 %222
        %224 = vadd.xlane.f32.xlu0 %v209
        %v225 = vpop.xlane.xlu0 %224
        %v226 = vmul.f32 %v187, 0.0078125
        %v227 = vmul.f32 %v189, 0.0078125
        %v228 = vmul.f32 %v191, 0.0078125
        %v229 = vmul.f32 %v193, 0.0078125
        %v230 = vmul.f32 %v195, 0.0078125
        %v231 = vmul.f32 %v197, 0.0078125
        %v232 = vmul.f32 %v199, 0.0078125
        %v233 = vmul.f32 %v201, 0.0078125
        %v234 = vmul.f32 %v187, %v226
        %v235 = vmul.f32 %v189, %v227
        %v236 = vmul.f32 %v191, %v228
        %v237 = vmul.f32 %v193, %v229
        %v238 = vmul.f32 %v195, %v230
        %v239 = vmul.f32 %v197, %v231
        %v240 = vmul.f32 %v199, %v232
        %v241 = vmul.f32 %v201, %v233
        %v242 = vsub.f32 %v211, %v234
        %v243 = vsub.f32 %v213, %v235
        %v244 = vsub.f32 %v215, %v236
        %v245 = vsub.f32 %v217, %v237
        %v246 = vsub.f32 %v219, %v238
        %v247 = vsub.f32 %v221, %v239
        %v248 = vsub.f32 %v223, %v240
        %v249 = vsub.f32 %v225, %v241
        %v250 = vrcp.pop 127.0
        %v251 = vmul.f32 %v242, %v250
        %v252 = vmul.f32 %v243, %v250
        %v253 = vmul.f32 %v244, %v250
        %v254 = vmul.f32 %v245, %v250
        %v255 = vmul.f32 %v246, %v250
        %v256 = vmul.f32 %v247, %v250
        %v257 = vmul.f32 %v248, %v250
        %v258 = vmul.f32 %v249, %v250
        %v259 = vmax.f32 %v251, 0.0
        %v260 = vmax.f32 %v252, 0.0
        %v261 = vmax.f32 %v253, 0.0
        %v262 = vmax.f32 %v254, 0.0
        %v263 = vmax.f32 %v255, 0.0
        %v264 = vmax.f32 %v256, 0.0
        %v265 = vmax.f32 %v257, 0.0
        %v266 = vmax.f32 %v258, 0.0
        %v267 = vrsqrt.pop %v259
        %v268 = vmul.f32 %v259, %v267
        %vm269 = vcmp.eq.f32.partialorder %v259, inf
        %v270 = vsel %vm269, %v259, %v268
        %vm271 = vcmp.eq.f32.partialorder %v259, 0.0
        %v272 = vand.u32 %v259, 2147483648
        %v273 = vsel %vm271, %v272, %v270
        %v274 = vrsqrt.pop %v260
        %v275 = vmul.f32 %v260, %v274
        %vm276 = vcmp.eq.f32.partialorder %v260, inf
        %v277 = vsel %vm276, %v260, %v275
        %vm278 = vcmp.eq.f32.partialorder %v260, 0.0
        %v279 = vand.u32 %v260, 2147483648
        %v280 = vsel %vm278, %v279, %v277
        %v281 = vrsqrt.pop %v261
        %v282 = vmul.f32 %v261, %v281
        %vm283 = vcmp.eq.f32.partialorder %v261, inf
        %v284 = vsel %vm283, %v261, %v282
        %vm285 = vcmp.eq.f32.partialorder %v261, 0.0
        %v286 = vand.u32 %v261, 2147483648
        %v287 = vsel %vm285, %v286, %v284
        %v288 = vrsqrt.pop %v262
        %v289 = vmul.f32 %v262, %v288
        %vm290 = vcmp.eq.f32.partialorder %v262, inf
        %v291 = vsel %vm290, %v262, %v289
        %vm292 = vcmp.eq.f32.partialorder %v262, 0.0
        %v293 = vand.u32 %v262, 2147483648
        %v294 = vsel %vm292, %v293, %v291
        %v295 = vrsqrt.pop %v263
        %v296 = vmul.f32 %v263, %v295
        %vm297 = vcmp.eq.f32.partialorder %v263, inf
        %v298 = vsel %vm297, %v263, %v296
        %vm299 = vcmp.eq.f32.partialorder %v263, 0.0
        %v300 = vand.u32 %v263, 2147483648
        %v301 = vsel %vm299, %v300, %v298
        %v302 = vrsqrt.pop %v264
        %v303 = vmul.f32 %v264, %v302
        %vm304 = vcmp.eq.f32.partialorder %v264, inf
        %v305 = vsel %vm304, %v264, %v303
        %vm306 = vcmp.eq.f32.partialorder %v264, 0.0
        %v307 = vand.u32 %v264, 2147483648
        %v308 = vsel %vm306, %v307, %v305
        %v309 = vrsqrt.pop %v265
        %v310 = vmul.f32 %v265, %v309
        %vm311 = vcmp.eq.f32.partialorder %v265, inf
        %v312 = vsel %vm311, %v265, %v310
        %vm313 = vcmp.eq.f32.partialorder %v265, 0.0
        %v314 = vand.u32 %v265, 2147483648
        %v315 = vsel %vm313, %v314, %v312
        %v316 = vrsqrt.pop %v266
        %v317 = vmul.f32 %v266, %v316
        %vm318 = vcmp.eq.f32.partialorder %v266, inf
        %v319 = vsel %vm318, %v266, %v317
        %vm320 = vcmp.eq.f32.partialorder %v266, 0.0
        %v321 = vand.u32 %v266, 2147483648
        %v322 = vsel %vm320, %v321, %v319
        %v323 = vadd.f32 %v273, 1e-06
        %v324 = vadd.f32 %v280, 1e-06
        %v325 = vadd.f32 %v287, 1e-06
        %v326 = vadd.f32 %v294, 1e-06
        %v327 = vadd.f32 %v301, 1e-06
        %v328 = vadd.f32 %v308, 1e-06
        %v329 = vadd.f32 %v315, 1e-06
        %v330 = vadd.f32 %v322, 1e-06
        %v331 = vrcp.pop %v323
        %v332 = vrcp.pop %v324
        %v333 = vrcp.pop %v325
        %v334 = vrcp.pop %v326
        %v335 = vrcp.pop %v327
        %v336 = vrcp.pop %v328
        %v337 = vrcp.pop %v329
        %v338 = vrcp.pop %v330
        %v339 = vmul.f32 %v323, %v331
        %v340 = vmul.f32 %v324, %v332
        %v341 = vmul.f32 %v325, %v333
        %v342 = vmul.f32 %v326, %v334
        %v343 = vmul.f32 %v327, %v335
        %v344 = vmul.f32 %v328, %v336
        %v345 = vmul.f32 %v329, %v337
        %v346 = vmul.f32 %v330, %v338
        %v347 = vsub.f32 2.0, %v339
        %v348 = vsub.f32 2.0, %v340
        %v349 = vsub.f32 2.0, %v341
        %v350 = vsub.f32 2.0, %v342
        %v351 = vsub.f32 2.0, %v343
        %v352 = vsub.f32 2.0, %v344
        %v353 = vsub.f32 2.0, %v345
        %v354 = vsub.f32 2.0, %v346
        %v355 = vmul.f32 %v331, %v347
        %v356 = vmul.f32 %v332, %v348
        %v357 = vmul.f32 %v333, %v349
        %v358 = vmul.f32 %v334, %v350
        %v359 = vmul.f32 %v335, %v351
        %v360 = vmul.f32 %v336, %v352
        %v361 = vmul.f32 %v337, %v353
        %v362 = vmul.f32 %v338, %v354
        %s363 = sld [smem:[#allocation6]]
        %s364 = sld [smem:[#allocation6 + $0x1]]
        %v365 = vsub.f32 %v178, %v226
        %v366 = vsub.f32 %v179, %v227
        %v367 = vsub.f32 %v180, %v228
        %v368 = vsub.f32 %v181, %v229
        %v369 = vsub.f32 %v182, %v230
        %v370 = vsub.f32 %v183, %v231
        %v371 = vsub.f32 %v184, %v232
        %v372 = vsub.f32 %v185, %v233
        %v373 = vmul.f32 %v365, %v355
        %v374 = vmul.f32 %v366, %v356
        %v375 = vmul.f32 %v367, %v357
        %v376 = vmul.f32 %v368, %v358
        %v377 = vmul.f32 %v369, %v359
        %v378 = vmul.f32 %v370, %v360
        %v379 = vmul.f32 %v371, %v361
        %v380 = vmul.f32 %v372, %v362
        %v381 = vstv %s363
        %v382 = vmul.f32 %v381, %v373
        %v383 = vmul.f32 %v381, %v374
        %v384 = vmul.f32 %v381, %v375
        %v385 = vmul.f32 %v381, %v376
        %v386 = vmul.f32 %v381, %v377
        %v387 = vmul.f32 %v381, %v378
        %v388 = vmul.f32 %v381, %v379
        %v389 = vmul.f32 %v381, %v380
        %v390 = vstv %s364
        %v391 = vadd.f32 %v382, %v390
        %v392 = vadd.f32 %v383, %v390
        %v393 = vadd.f32 %v384, %v390
        %v394 = vadd.f32 %v385, %v390
        %v395 = vadd.f32 %v386, %v390
        %v396 = vadd.f32 %v387, %v390
        %v397 = vadd.f32 %v388, %v390
        %v398 = vadd.f32 %v389, %v390
        %399 = vst [vmem:[%s175] sm:$0xff] %v391
        %400 = vst [vmem:[%s175 + $0x8] sm:$0xff] %v392
        %401 = vst [vmem:[%s175 + $0x10] sm:$0xff] %v393
        %402 = vst [vmem:[%s175 + $0x18] sm:$0xff] %v394
        %403 = vst [vmem:[%s175 + $0x20] sm:$0xff] %v395
        %404 = vst [vmem:[%s175 + $0x28] sm:$0xff] %v396
        %405 = vst [vmem:[%s175 + $0x30] sm:$0xff] %v397
        %406 = vst [vmem:[%s175 + $0x38] sm:$0xff] %v398
        %s407 = sand.u32 %s75, 1
        %s408 = scalar_lea.sflag [#allocation4], %s407
        %s409 = sand.u32 %s75, 1
        %s410 = smul.addr %s409, 64
        %s411 = scalar_lea.vmem [#allocation7], %s410
        // Predicated region
        $region37: #{tpu_custom_call.1} parent=27 // pred_check
          %p412 = pneg %p85
        $region38: #{tpu_custom_call.1} parent=27 // pred_check_branch
          %414 = sbr.rel (%p412) target = $region40
        $region39: #{tpu_custom_call.1} parent=27 // pred_region
          %s415 = smul.u32 8, %s20
          %s417 = ssub.s32 1024, 1024
          %418 = vsyncadd %s408, %s417
          %s419 = smul.addr %s415, 128
          %s420 = scalar_lea.hbm %s2, %s419
          %s421 = sshll.u32 %s411, 4
          %s422 = int_to_ptr.vmem [resolvable:$true] %s421
          %427 = dma.vmem_to_hbm [thread:$0]  %s422, 1024, %s420, %s408, 128, 128, 8
        $region40: #{tpu_custom_call.1} parent=27 // pred_fallthru
          _
      $region28: #{tpu_custom_call.1} parent=5 // pred_fallthru
        _
      %p428 = scmp.le.s32.totalorder 2, %s15
      // Predicated region
      $region41: #{tpu_custom_call.1} parent=5 // pred_check
        %p429 = pneg %p428
      $region42: #{tpu_custom_call.1} parent=5 // pred_check_branch
        %431 = sbr.rel (%p429) target = $region44
      $region43: #{tpu_custom_call.1} parent=5 // pred_region
        %s432 = ssub.s32 %s15, 2
        // Predicated region
        $region45: #{tpu_custom_call.1} parent=43 // pred_check
          %p433 = pneg %p91
        $region46: #{tpu_custom_call.1} parent=43 // pred_check_branch
          %435 = sbr.rel (%p433) target = $region48
        $region47: #{tpu_custom_call.1} parent=43 // pred_region
          %s436 = sand.u32 %s76, 1
          %s437 = scalar_lea.sflag [#allocation4], %s436
          %s438 = sand.u32 %s76, 1
          %s439 = smul.addr %s438, 64
          %s440 = scalar_lea.vmem [#allocation7], %s439
          %441 = dma.done %s437, 1024
        $region48: #{tpu_custom_call.1} parent=43 // pred_fallthru
          _
      $region44: #{tpu_custom_call.1} parent=5 // pred_fallthru
        _
    $region6: #{tpu_custom_call.1} parent=1 // loop_footer
      %s19 = sadd.s32 1, %s15
    $region7: #{tpu_custom_call.1} parent=1 // loop_footer_branch
      %14 = sbr.rel target = $region3
    $region8: #{tpu_custom_call.1} parent=1 // loop_exit
      _
    %442 = vsyncpa [#allocation3], 1
    %s443 = scalar_lea.sflag [#allocation3], 1
    %444 = vsyncpa %s443, 1
    %445 = vsyncpa [#allocation4], 1
    %s446 = scalar_lea.sflag [#allocation4], 1
    %447 = vsyncpa %s446, 1
    %448 = vsyncpa [#allocation5], 1
    %s449 = scalar_lea.sflag [#allocation5], 1
    %450 = vsyncpa %s449, 1

</llo_original>
